<compile_context>
chip_gen: v5e
topology: v5e:2x2
jax: 0.10.0
libtpu: 0.0.40
codegen_flags: <defaults>
</compile_context>

<pallas_src>
import jax
import jax.numpy as jnp
from jax.experimental import pallas as pl
from jax.experimental.pallas import tpu as pltpu

HIDDEN_PAD = 128  # pad the 100 / 50 hidden units to full 128-lane vregs


# ----------------------------- Pallas kernel ------------------------------- #

def dqnet_fused_kernel(x_ref, w1_ref, b1_ref, w2_ref, b2_ref, w3_ref, b3_ref,
                       out_ref):
    # [folded conv + Linear] -> ReLU -> Linear -> ReLU -> Linear, all in VMEM.
    x = x_ref[...]                                                 # (bm, d_in)
    h1 = jnp.dot(x, w1_ref[...], preferred_element_type=jnp.float32) + b1_ref[...]
    h1 = jnp.maximum(h1, 0.0)
    h2 = jnp.dot(h1, w2_ref[...], preferred_element_type=jnp.float32) + b2_ref[...]
    h2 = jnp.maximum(h2, 0.0)
    out_ref[...] = (
        jnp.dot(h2, w3_ref[...], preferred_element_type=jnp.float32) + b3_ref[...]
    )


# ------------------------- one-time weight preparation ---------------------- #

def init_params(key, input_dim):
    # PyTorch-layout parameters (as nn.Module would hold them).
    H, W = input_dim
    d_in = 20 * H * (W + 1)
    keys = jax.random.split(key, 8)
    s = 0.1
    return {
        "conv_w": jax.random.normal(keys[0], (20, 2, 1, 2), jnp.float32) * s,
        "conv_b": jax.random.normal(keys[1], (20,), jnp.float32) * s,
        "w1": jax.random.normal(keys[2], (100, d_in), jnp.float32) * s,
        "b1": jax.random.normal(keys[3], (100,), jnp.float32) * s,
        "w2": jax.random.normal(keys[4], (50, 100), jnp.float32) * s,
        "b2": jax.random.normal(keys[5], (50,), jnp.float32) * s,
        "w3": jax.random.normal(keys[6], (1, 50), jnp.float32) * s,
        "b3": jax.random.normal(keys[7], (1,), jnp.float32) * s,
    }


def prepare_params(params, input_dim):
    """Fold conv + flatten + first Linear into one matrix; pad hiddens to 128.

    Runs ONCE (weights are static at inference); nothing here is on the
    per-call path.
    """
    H, W = input_dim
    Wout = W + 1
    Cout = 20

    # W1 viewed in PyTorch's flatten order (c_out, h, w_out).
    w1r = params["w1"].reshape(100, Cout, H, Wout)        # (j, o, h, w_out)
    cw = params["conv_w"][:, :, 0, :]                     # (o, c_in, kw)

    # Input pixel (c_in, h, w) feeds conv output (o, h, w+1) via kw=0 and
    # (o, h, w) via kw=1 (left pad of 1, kernel width 2).  Both always valid.
    term0 = jnp.einsum("oc,johw->chwj", cw[:, :, 0], w1r[:, :, :, 1:Wout])
    term1 = jnp.einsum("oc,johw->chwj", cw[:, :, 1], w1r[:, :, :, 0:W])
    w_eff = (term0 + term1).reshape(2 * H * W, 100)       # matches x.reshape(N,-1)
    b_eff = params["b1"] + jnp.einsum("o,johw->j", params["conv_b"], w1r)

    # Zero-pad hidden dims 100/50 -> 128 for lane-dense matmul outputs.
    d_in = 2 * H * W
    w1p = jnp.zeros((d_in, HIDDEN_PAD), jnp.float32).at[:, :100].set(w_eff)
    b1p = jnp.zeros((1, HIDDEN_PAD), jnp.float32).at[:, :100].set(b_eff)
    w2p = jnp.zeros((HIDDEN_PAD, HIDDEN_PAD), jnp.float32).at[:100, :50].set(
        params["w2"].T)
    b2p = jnp.zeros((1, HIDDEN_PAD), jnp.float32).at[:, :50].set(params["b2"])
    w3p = jnp.zeros((HIDDEN_PAD, 1), jnp.float32).at[:50, :].set(params["w3"].T)
    b3p = params["b3"].reshape(1, 1)
    return {"w1": w1p, "b1": b1p, "w2": w2p, "b2": b2p, "w3": w3p, "b3": b3p}


# ------------------------------ forward pass -------------------------------- #

@jax.jit
def dqnet_forward(x, prep):
    N, C, H, W = x.shape
    d_in = C * H * W
    x_flat = x.reshape(N, d_in)          # contiguous reshape: the only glue op

    h1 = prep["w1"].shape[1]
    h2 = prep["w2"].shape[1]

    # Batch grid: single step at small N; blocks of 256 rows (parallel across
    # TensorCores on multi-core parts) if the batch grows.
    bm = N if N <= 256 else 256
    grid = (pl.cdiv(N, bm),)

    cost = pl.CostEstimate(
        flops=2 * N * (d_in * h1 + h1 * h2 + h2 * 1),
        transcendentals=0,
        bytes_accessed=4 * (N * d_in + d_in * h1 + h1
                            + h1 * h2 + h2 + h2 + 1 + N),
    )

    def const2d(shape):
        return pl.BlockSpec(shape, lambda i: (0, 0))

    return pl.pallas_call(
        dqnet_fused_kernel,
        out_shape=jax.ShapeDtypeStruct((N, 1), jnp.float32),
        grid=grid,
        in_specs=[
            pl.BlockSpec((bm, d_in), lambda i: (i, 0)),
            const2d(prep["w1"].shape),
            const2d(prep["b1"].shape),
            const2d(prep["w2"].shape),
            const2d(prep["b2"].shape),
            const2d(prep["w3"].shape),
            const2d(prep["b3"].shape),
        ],
        out_specs=pl.BlockSpec((bm, 1), lambda i: (i, 0)),
        compiler_params=pltpu.CompilerParams(dimension_semantics=("parallel",)),
        cost_estimate=cost,
    )(x_flat, prep["w1"], prep["b1"], prep["w2"], prep["b2"],
      prep["w3"], prep["b3"])


# ------------------------------- reference ---------------------------------- #

def dqnet_reference(x, params):
    # Pure-JAX reference mirroring PyTorch semantics (validation only).
    conv = jax.lax.conv_general_dilated(
        x, params["conv_w"], window_strides=(1, 1),
        padding=((0, 0), (1, 1)),
        dimension_numbers=("NCHW", "OIHW", "NCHW"))
    conv = conv + params["conv_b"][None, :, None, None]
    feat = conv.reshape(x.shape[0], -1)       # torch.flatten(x1, 1): (c,h,w) order
    h1 = jnp.maximum(feat @ params["w1"].T + params["b1"], 0.0)
    h2 = jnp.maximum(h1 @ params["w2"].T + params["b2"], 0.0)
    return h2 @ params["w3"].T + params["b3"]


if __name__ == "__main__":
    input_dim = (4, 8)   # (H, W) -> dense input = 20 * 4 * (8 + 1) = 720
    N = 2

    key = jax.random.PRNGKey(0)
    kx, kp = jax.random.split(key)
    x = jax.random.normal(kx, (N, 2, input_dim[0], input_dim[1]), jnp.float32)
    params = init_params(kp, input_dim)
    prep = prepare_params(params, input_dim)   # one-time fold / pad

    y = dqnet_forward(x, prep)
    y = jax.block_until_ready(y)

    y_ref = dqnet_reference(x, params)
    assert y.shape == (N, 1)
    assert jnp.allclose(y, y_ref, rtol=1e-4, atol=1e-4)

    print("KERNEL_OK")
</pallas_src>

<mosaic_0001>
module attributes {stable_mosaic.version = 11 : i64} {
  func.func @dqnet_fused_kernel(%arg0: i32, %arg1: memref<2x64xf32, #tpu.memory_space<vmem>>, %arg2: memref<64x128xf32, #tpu.memory_space<vmem>>, %arg3: memref<1x128xf32, #tpu.memory_space<vmem>>, %arg4: memref<128x128xf32, #tpu.memory_space<vmem>>, %arg5: memref<1x128xf32, #tpu.memory_space<vmem>>, %arg6: memref<128x1xf32, #tpu.memory_space<vmem>>, %arg7: memref<1x1xf32, #tpu.memory_space<vmem>>, %arg8: memref<2x1xf32, #tpu.memory_space<vmem>>) attributes {dimension_semantics = [#tpu.dimension_semantics<parallel>], iteration_bounds = array<i64: 1>, scalar_prefetch = 0 : i64, scratch_operands = 0 : i64, tpu.core_type = #tpu.core_type<tc>, window_params = [{transform_indices = @transform_0, window_bounds = array<i64: 2, 64>}, {pipeline_mode = #tpu.pipeline_mode<synchronous>, transform_indices = @transform_1, window_bounds = array<i64: 64, 128>}, {pipeline_mode = #tpu.pipeline_mode<synchronous>, transform_indices = @transform_2, window_bounds = array<i64: 1, 128>}, {pipeline_mode = #tpu.pipeline_mode<synchronous>, transform_indices = @transform_3, window_bounds = array<i64: 128, 128>}, {pipeline_mode = #tpu.pipeline_mode<synchronous>, transform_indices = @transform_4, window_bounds = array<i64: 1, 128>}, {pipeline_mode = #tpu.pipeline_mode<synchronous>, transform_indices = @transform_5, window_bounds = array<i64: 128, 1>}, {pipeline_mode = #tpu.pipeline_mode<synchronous>, transform_indices = @transform_6, window_bounds = array<i64: 1, 1>}, {transform_indices = @transform_7, window_bounds = array<i64: 2, 1>}]} {
    %c0 = arith.constant 0 : index
    %c0_0 = arith.constant 0 : index
    %0 = vector.load %arg1[%c0, %c0_0] : memref<2x64xf32, #tpu.memory_space<vmem>>, vector<2x64xf32>
    %c0_1 = arith.constant 0 : index
    %c0_2 = arith.constant 0 : index
    %1 = vector.load %arg2[%c0_1, %c0_2] : memref<64x128xf32, #tpu.memory_space<vmem>>, vector<64x128xf32>
    %cst = arith.constant dense<0.000000e+00> : vector<2x128xf32>
    %2 = tpu.matmul %0, %1, %cst {dimension_numbers = #tpu.dot_dimension_numbers<[1], [0], [0], [1], [0, 0, 1, 1], [], []>} : vector<2x64xf32>, vector<64x128xf32>, vector<2x128xf32> -> vector<2x128xf32>
    %c0_3 = arith.constant 0 : index
    %c0_4 = arith.constant 0 : index
    %3 = vector.load %arg3[%c0_3, %c0_4] : memref<1x128xf32, #tpu.memory_space<vmem>>, vector<1x128xf32>
    %4 = vector.broadcast %3 : vector<1x128xf32> to vector<2x128xf32>
    %5 = arith.addf %2, %4 : vector<2x128xf32>
    %cst_5 = arith.constant 0.000000e+00 : f32
    %6 = vector.broadcast %cst_5 : f32 to vector<2x128xf32>
    %7 = arith.maximumf %5, %6 : vector<2x128xf32>
    %c0_6 = arith.constant 0 : index
    %c0_7 = arith.constant 0 : index
    %8 = vector.load %arg4[%c0_6, %c0_7] : memref<128x128xf32, #tpu.memory_space<vmem>>, vector<128x128xf32>
    %cst_8 = arith.constant dense<0.000000e+00> : vector<2x128xf32>
    %9 = tpu.matmul %7, %8, %cst_8 {dimension_numbers = #tpu.dot_dimension_numbers<[1], [0], [0], [1], [0, 0, 1, 1], [], []>} : vector<2x128xf32>, vector<128x128xf32>, vector<2x128xf32> -> vector<2x128xf32>
    %c0_9 = arith.constant 0 : index
    %c0_10 = arith.constant 0 : index
    %10 = vector.load %arg5[%c0_9, %c0_10] : memref<1x128xf32, #tpu.memory_space<vmem>>, vector<1x128xf32>
    %11 = vector.broadcast %10 : vector<1x128xf32> to vector<2x128xf32>
    %12 = arith.addf %9, %11 : vector<2x128xf32>
    %cst_11 = arith.constant 0.000000e+00 : f32
    %13 = vector.broadcast %cst_11 : f32 to vector<2x128xf32>
    %14 = arith.maximumf %12, %13 : vector<2x128xf32>
    %c0_12 = arith.constant 0 : index
    %c0_13 = arith.constant 0 : index
    %15 = vector.load %arg6[%c0_12, %c0_13] : memref<128x1xf32, #tpu.memory_space<vmem>>, vector<128x1xf32>
    %cst_14 = arith.constant dense<0.000000e+00> : vector<2x1xf32>
    %16 = tpu.matmul %14, %15, %cst_14 {dimension_numbers = #tpu.dot_dimension_numbers<[1], [0], [0], [1], [0, 0, 1, 1], [], []>} : vector<2x128xf32>, vector<128x1xf32>, vector<2x1xf32> -> vector<2x1xf32>
    %c0_15 = arith.constant 0 : index
    %c0_16 = arith.constant 0 : index
    %17 = vector.load %arg7[%c0_15, %c0_16] : memref<1x1xf32, #tpu.memory_space<vmem>>, vector<1x1xf32>
    %18 = vector.broadcast %17 : vector<1x1xf32> to vector<2x1xf32>
    %19 = arith.addf %16, %18 : vector<2x1xf32>
    %c0_17 = arith.constant 0 : index
    %c0_18 = arith.constant 0 : index
    %20 = vector.load %arg8[%c0_17, %c0_18] : memref<2x1xf32, #tpu.memory_space<vmem>>, vector<2x1xf32>
    tpu.vector_store %arg8[%c0_17, %c0_18], %19 {strides = array<i32>} : memref<2x1xf32, #tpu.memory_space<vmem>>, vector<2x1xf32>,
    return
  }
  func.func @transform_0(%arg0: i32) -> (i32, i32) {
    %c0_i32 = arith.constant 0 : i32
    %c0_i32_0 = arith.constant 0 : i32
    return %arg0, %c0_i32 : i32, i32
  }
  func.func @transform_1(%arg0: i32) -> (i32, i32) {
    %c0_i32 = arith.constant 0 : i32
    %c0_i32_0 = arith.constant 0 : i32
    %c0_i32_1 = arith.constant 0 : i32
    return %c0_i32, %c0_i32_0 : i32, i32
  }
  func.func @transform_2(%arg0: i32) -> (i32, i32) {
    %c0_i32 = arith.constant 0 : i32
    %c0_i32_0 = arith.constant 0 : i32
    %c0_i32_1 = arith.constant 0 : i32
    return %c0_i32, %c0_i32_0 : i32, i32
  }
  func.func @transform_3(%arg0: i32) -> (i32, i32) {
    %c0_i32 = arith.constant 0 : i32
    %c0_i32_0 = arith.constant 0 : i32
    %c0_i32_1 = arith.constant 0 : i32
    return %c0_i32, %c0_i32_0 : i32, i32
  }
  func.func @transform_4(%arg0: i32) -> (i32, i32) {
    %c0_i32 = arith.constant 0 : i32
    %c0_i32_0 = arith.constant 0 : i32
    %c0_i32_1 = arith.constant 0 : i32
    return %c0_i32, %c0_i32_0 : i32, i32
  }
  func.func @transform_5(%arg0: i32) -> (i32, i32) {
    %c0_i32 = arith.constant 0 : i32
    %c0_i32_0 = arith.constant 0 : i32
    %c0_i32_1 = arith.constant 0 : i32
    return %c0_i32, %c0_i32_0 : i32, i32
  }
  func.func @transform_6(%arg0: i32) -> (i32, i32) {
    %c0_i32 = arith.constant 0 : i32
    %c0_i32_0 = arith.constant 0 : i32
    %c0_i32_1 = arith.constant 0 : i32
    return %c0_i32, %c0_i32_0 : i32, i32
  }
  func.func @transform_7(%arg0: i32) -> (i32, i32) {
    %c0_i32 = arith.constant 0 : i32
    %c0_i32_0 = arith.constant 0 : i32
    return %arg0, %c0_i32 : i32, i32
  }
}

</mosaic_0001>

<llo_original>
// kernel: dqnet_forward.1
$region0: #{dqnet_forward.1}
  #allocation0 [shape = 'u32[]', space=smem, size = 0x4, offset = 0x4, fixed_abs, tag = 'smem constant byte address 0x4 - core index']
  #allocation1 [shape = 'u32[72,128]{1,0:T(1,128)}', space=vmem, size = 0x9000, scoped, tag = 'internal scratch']
  #allocation2 [shape = 'f32[1,1]{1,0:T(1,128)S(1)}', space=vmem, size = 0x200, scoped, tag = 'scoped memory for dqnet_forward.1']
  %s0 = inlined_call_operand.vmem [shape: f32[2,64], index: 0, kind: input, shape index: {}]
  %s1 = inlined_call_operand.hbm [shape: f32[64,128], index: 1, kind: input, shape index: {}]
  %s2 = inlined_call_operand.vmem [shape: f32[1,128], index: 2, kind: input, shape index: {}]
  %s3 = inlined_call_operand.vmem [shape: f32[128,128], index: 3, kind: input, shape index: {}]
  %s4 = inlined_call_operand.vmem [shape: f32[1,128], index: 4, kind: input, shape index: {}]
  %s5 = inlined_call_operand.vmem [shape: f32[128,1], index: 5, kind: input, shape index: {}]
  %s6 = inlined_call_operand.<no memory space> [shape: f32[1,1], index: 6, kind: input, shape index: {}]
  %s7 = inlined_call_operand.vmem [shape: f32[2,1], index: 7, kind: output, shape index: {}]
  %s8 = sld [smem:[#allocation0]]
  $region42: #{dqnet_forward.1} parent=0
    _
  %s10 = ssub.s32 1, %s8
  %s11 = scalar_select 0, %s10, %s8
  %v12 = vstv %s6
  %13 = vst [vmem:[#allocation2] sm:$0x1] %v12
  $region1: #{dqnet_forward.1} parent=0
    #allocation3 [shape = 'u8[32768]{0}', space=vmem, size = 0x8000, scoped, tag = 'input window, operand 1, single buffered']
    #allocation4 [shape = 's32[1]{0}', space=sflag, size = 0x4, scoped, tag = 'scoped memory for dqnet_forward.1']
    %14 = vsyncpa [#allocation4], 0
    // Predicated region
    $region2: #{dqnet_forward.1} parent=1 // pred_check
      _
    $region3: #{dqnet_forward.1} parent=1 // pred_check_branch
      %16 = sbr.rel (0) target = $region5
    $region4: #{dqnet_forward.1} parent=1 // pred_region
      _
    $region5: #{dqnet_forward.1} parent=1 // pred_fallthru
      _
    // Predicated region
    $region6: #{dqnet_forward.1} parent=1 // pred_check
      _
    $region7: #{dqnet_forward.1} parent=1 // pred_check_branch
      %18 = sbr.rel (0) target = $region9
    $region8: #{dqnet_forward.1} parent=1 // pred_region
      %20 = vsyncadd [#allocation4], 0
      %s21 = sshll.u32 %s1, 4
      %s22 = int_to_ptr.hbm [resolvable:$true] %s21
      %s23 = sshll.u32 [#allocation3], 4
      %s24 = int_to_ptr.vmem [resolvable:$true] %s23
      %29 = dma.hbm_to_vmem [thread:$0]  %s22, 1024, %s24, [#allocation4], 128, 128, 8
    $region9: #{dqnet_forward.1} parent=1 // pred_fallthru
      _
    // Predicated region
    $region10: #{dqnet_forward.1} parent=1 // pred_check
      _
    $region11: #{dqnet_forward.1} parent=1 // pred_check_branch
      %31 = sbr.rel (0) target = $region13
    $region12: #{dqnet_forward.1} parent=1 // pred_region
      _
    $region13: #{dqnet_forward.1} parent=1 // pred_fallthru
      _
    // Predicated region
    $region14: #{dqnet_forward.1} parent=1 // pred_check
      _
    $region15: #{dqnet_forward.1} parent=1 // pred_check_branch
      %33 = sbr.rel (0) target = $region17
    $region16: #{dqnet_forward.1} parent=1 // pred_region
      _
    $region17: #{dqnet_forward.1} parent=1 // pred_fallthru
      _
    // Predicated region
    $region18: #{dqnet_forward.1} parent=1 // pred_check
      _
    $region19: #{dqnet_forward.1} parent=1 // pred_check_branch
      %35 = sbr.rel (0) target = $region21
    $region20: #{dqnet_forward.1} parent=1 // pred_region
      _
    $region21: #{dqnet_forward.1} parent=1 // pred_fallthru
      _
    // Predicated region
    $region22: #{dqnet_forward.1} parent=1 // pred_check
      _
    $region23: #{dqnet_forward.1} parent=1 // pred_check_branch
      %37 = sbr.rel (0) target = $region25
    $region24: #{dqnet_forward.1} parent=1 // pred_region
      _
    $region25: #{dqnet_forward.1} parent=1 // pred_fallthru
      _
    // Predicated region
    $region26: #{dqnet_forward.1} parent=1 // pred_check
      _
    $region27: #{dqnet_forward.1} parent=1 // pred_check_branch
      %39 = sbr.rel (0) target = $region29
    $region28: #{dqnet_forward.1} parent=1 // pred_region
      _
    $region29: #{dqnet_forward.1} parent=1 // pred_fallthru
      _
    // Predicated region
    $region30: #{dqnet_forward.1} parent=1 // pred_check
      _
    $region31: #{dqnet_forward.1} parent=1 // pred_check_branch
      %41 = sbr.rel (0) target = $region33
    $region32: #{dqnet_forward.1} parent=1 // pred_region
      %43 = dma.done [#allocation4], 1024
    $region33: #{dqnet_forward.1} parent=1 // pred_fallthru
      _
    %v44 = vld [vmem:[%s0] sm:$0x3]
    %v45 = vld [vmem:[#allocation3] sm:$0xff]
    %v46 = vld [vmem:[#allocation3 + $0x8] sm:$0xff]
    %v47 = vld [vmem:[#allocation3 + $0x10] sm:$0xff]
    %v48 = vld [vmem:[#allocation3 + $0x18] sm:$0xff]
    %v49 = vld [vmem:[#allocation3 + $0x20] sm:$0xff]
    %v50 = vld [vmem:[#allocation3 + $0x28] sm:$0xff]
    %v51 = vld [vmem:[#allocation3 + $0x30] sm:$0xff]
    %v52 = vld [vmem:[#allocation3 + $0x38] sm:$0xff]
    %v53 = vld [vmem:[%s2] sm:$0x1]
    %v55 = vperm.slane %v53, 0
    %vm57 = vcmask 523264
    %v59 = vsel %vm57, %v44, 0
    %61 = vmatpush.msra.mxu0 0.0
    %62 = vmatpush.msra.mxu0 0.0
    %63 = vmatpush.msra.mxu0 0.0
    %64 = vmatpush.msra.mxu0 0.0
    %65 = vmatpush.msra.mxu0 0.0
    %66 = vmatpush.msra.mxu0 0.0
    %67 = vmatpush.msra.mxu0 0.0
    %68 = vmatpush.msra.mxu0 0.0
    %69 = vmatpush.msra.mxu0 %v52
    %70 = vmatpush.msra.mxu0 %v51
    %71 = vmatpush.msra.mxu0 %v50
    %72 = vmatpush.msra.mxu0 %v49
    %73 = vmatpush.msra.mxu0 %v48
    %74 = vmatpush.msra.mxu0 %v47
    %75 = vmatpush.msra.mxu0 %v46
    %76 = vmatpush.msra.mxu0 %v45
    %77 = vmatmul.f32.gmra.mxu0 %v59
    %v78 = vpop.f32.mrf.mxu0
    %v79 = vadd.f32 %v55, %v78
    %80 = vdwg.mxu0
    %v81 = vmax.f32 %v79, 0.0
    %v82 = vld [vmem:[%s3] sm:$0xff]
    %v83 = vld [vmem:[%s3 + $0x8] sm:$0xff]
    %v84 = vld [vmem:[%s3 + $0x10] sm:$0xff]
    %v85 = vld [vmem:[%s3 + $0x18] sm:$0xff]
    %v86 = vld [vmem:[%s3 + $0x20] sm:$0xff]
    %v87 = vld [vmem:[%s3 + $0x28] sm:$0xff]
    %v88 = vld [vmem:[%s3 + $0x30] sm:$0xff]
    %v89 = vld [vmem:[%s3 + $0x38] sm:$0xff]
    %v90 = vld [vmem:[%s3 + $0x40] sm:$0xff]
    %v91 = vld [vmem:[%s3 + $0x48] sm:$0xff]
    %v92 = vld [vmem:[%s3 + $0x50] sm:$0xff]
    %v93 = vld [vmem:[%s3 + $0x58] sm:$0xff]
    %v94 = vld [vmem:[%s3 + $0x60] sm:$0xff]
    %v95 = vld [vmem:[%s3 + $0x68] sm:$0xff]
    %v96 = vld [vmem:[%s3 + $0x70] sm:$0xff]
    %v97 = vld [vmem:[%s3 + $0x78] sm:$0xff]
    %v98 = vld [vmem:[%s4] sm:$0x1]
    %v100 = vperm.slane %v98, 0
    %102 = vmatpush.msra.mxu0 %v97
    %103 = vmatpush.msra.mxu0 %v96
    %104 = vmatpush.msra.mxu0 %v95
    %105 = vmatpush.msra.mxu0 %v94
    %106 = vmatpush.msra.mxu0 %v93
    %107 = vmatpush.msra.mxu0 %v92
    %108 = vmatpush.msra.mxu0 %v91
    %109 = vmatpush.msra.mxu0 %v90
    %110 = vmatpush.msra.mxu0 %v89
    %111 = vmatpush.msra.mxu0 %v88
    %112 = vmatpush.msra.mxu0 %v87
    %113 = vmatpush.msra.mxu0 %v86
    %114 = vmatpush.msra.mxu0 %v85
    %115 = vmatpush.msra.mxu0 %v84
    %116 = vmatpush.msra.mxu0 %v83
    %117 = vmatpush.msra.mxu0 %v82
    %118 = vmatmul.f32.gmra.mxu0 %v81
    %v119 = vpop.f32.mrf.mxu0
    %v120 = vadd.f32 %v100, %v119
    %121 = vdwg.mxu0
    %v122 = vmax.f32 %v120, 0.0
    %v123 = vld [vmem:[%s5] sm:$0xff]
    %v124 = vld [vmem:[%s5 + $0x8] sm:$0xff]
    %v125 = vld [vmem:[%s5 + $0x10] sm:$0xff]
    %v126 = vld [vmem:[%s5 + $0x18] sm:$0xff]
    %v127 = vld [vmem:[%s5 + $0x20] sm:$0xff]
    %v128 = vld [vmem:[%s5 + $0x28] sm:$0xff]
    %v129 = vld [vmem:[%s5 + $0x30] sm:$0xff]
    %v130 = vld [vmem:[%s5 + $0x38] sm:$0xff]
    %v131 = vld [vmem:[%s5 + $0x40] sm:$0xff]
    %v132 = vld [vmem:[%s5 + $0x48] sm:$0xff]
    %v133 = vld [vmem:[%s5 + $0x50] sm:$0xff]
    %v134 = vld [vmem:[%s5 + $0x58] sm:$0xff]
    %v135 = vld [vmem:[%s5 + $0x60] sm:$0xff]
    %v136 = vld [vmem:[%s5 + $0x68] sm:$0xff]
    %v137 = vld [vmem:[%s5 + $0x70] sm:$0xff]
    %v138 = vld [vmem:[%s5 + $0x78] sm:$0xff]
    %v139 = vld [vmem:[#allocation2] sm:$0x1]
    %v141 = vperm.slane %v139, 0
    %143 = vmatpush.msra.mxu0 %v138
    %144 = vmatpush.msra.mxu0 %v137
    %145 = vmatpush.msra.mxu0 %v136
    %146 = vmatpush.msra.mxu0 %v135
    %147 = vmatpush.msra.mxu0 %v134
    %148 = vmatpush.msra.mxu0 %v133
    %149 = vmatpush.msra.mxu0 %v132
    %150 = vmatpush.msra.mxu0 %v131
    %151 = vmatpush.msra.mxu0 %v130
    %152 = vmatpush.msra.mxu0 %v129
    %153 = vmatpush.msra.mxu0 %v128
    %154 = vmatpush.msra.mxu0 %v127
    %155 = vmatpush.msra.mxu0 %v126
    %156 = vmatpush.msra.mxu0 %v125
    %157 = vmatpush.msra.mxu0 %v124
    %158 = vmatpush.msra.mxu0 %v123
    %159 = vmatmul.f32.gmra.mxu0 %v122
    %v160 = vpop.f32.mrf.mxu0
    %v161 = vadd.f32 %v141, %v160
    %162 = vdwg.mxu0
    %vm163 = vcmask 1024
    %164 = vst.msk [vmem:[%s7] sm:$0x3] %vm163, %v161
    // Predicated region
    $region34: #{dqnet_forward.1} parent=1 // pred_check
      _
    $region35: #{dqnet_forward.1} parent=1 // pred_check_branch
      %166 = sbr.rel (0) target = $region37
    $region36: #{dqnet_forward.1} parent=1 // pred_region
      _
    $region37: #{dqnet_forward.1} parent=1 // pred_fallthru
      _
    // Predicated region
    $region38: #{dqnet_forward.1} parent=1 // pred_check
      _
    $region39: #{dqnet_forward.1} parent=1 // pred_check_branch
      %168 = sbr.rel (0) target = $region41
    $region40: #{dqnet_forward.1} parent=1 // pred_region
      _
    $region41: #{dqnet_forward.1} parent=1 // pred_fallthru
      _
    %169 = vsyncpa [#allocation4], 1

</llo_original>
